<compile_context>
chip_gen: v7x
topology: tpu7x:2x2x1
jax: 0.10.0
libtpu: 0.0.40
codegen_flags: <defaults>
</compile_context>

<pallas_src>
import functools
import math

import jax
import jax.numpy as jnp
from jax.experimental import pallas as pl
from jax.experimental.pallas import tpu as pltpu


def _eca_kernel_size(channel: int, b: int = 1, gamma: int = 2) -> int:
    k = int(abs((math.log(channel, 2) + b) / gamma))
    return k if k % 2 else k + 1


# ---------------------------------------------------------------------------
# Kernels
# ---------------------------------------------------------------------------

def _fused_kernel(x_ref, band_ref, o_ref):
    # x_ref: (1, C, HW) lane-dense slab; band_ref: (C, C) Conv1d-as-band-matrix
    # pre-scaled by 1/HW; o_ref: (1, C, HW).
    x = x_ref[0]                                                    # (C, HW)
    s = jnp.sum(x.astype(jnp.float32), axis=-1, keepdims=True)      # (C, 1) sums
    conv = jnp.dot(band_ref[...], s, preferred_element_type=jnp.float32)
    att = 1.0 / (1.0 + jnp.exp(-conv))                              # sigmoid (EUP)
    o_ref[0] = (x * att.astype(x.dtype)).astype(o_ref.dtype)


def _pool_att_kernel(x_ref, band_ref, att_ref, *, hw, hw_tile, mask_tail):
    # Fallback pass 1: accumulate per-channel sums into the output-resident
    # (1, C, 1) block across the HW-tile axis; finalize (conv + sigmoid) on the
    # last tile so no plain-JAX glue is needed between the two passes.
    t = pl.program_id(1)

    @pl.when(t == 0)
    def _():
        att_ref[...] = jnp.zeros_like(att_ref)

    xt = x_ref[...].astype(jnp.float32)                             # (1, C, hw_tile)
    if mask_tail:
        lane = jax.lax.broadcasted_iota(jnp.int32, xt.shape, 2)
        xt = jnp.where(t * hw_tile + lane < hw, xt, 0.0)
    att_ref[...] += jnp.sum(xt, axis=-1, keepdims=True)

    @pl.when(t == pl.num_programs(1) - 1)
    def _():
        conv = jnp.dot(band_ref[...], att_ref[0],
                       preferred_element_type=jnp.float32)           # (C, 1)
        att_ref[0] = 1.0 / (1.0 + jnp.exp(-conv))


def _scale_kernel(x_ref, att_ref, o_ref):
    # Fallback pass 2: out = x * att, broadcast over the lane (HW) axis.
    # Multiply in the input dtype; the (1, C, 1) cast is negligible per tile.
    o_ref[...] = (x_ref[...] * att_ref[...].astype(x_ref.dtype)).astype(o_ref.dtype)


# ---------------------------------------------------------------------------
# Wrapper helpers
# ---------------------------------------------------------------------------

def _band_matrix(conv_weight: jnp.ndarray, channels: int, scale: float) -> jnp.ndarray:
    """(C, C) matrix B with B[c, j] = w[j - c + pad] inside the band, else 0.

    B @ channel_sums == Conv1d(1, 1, k, padding=(k-1)//2, bias=False) applied to
    the per-channel means, because B is pre-scaled by 1/HW (the conv is linear).
    """
    k = conv_weight.shape[0]
    pad = (k - 1) // 2
    c = jnp.arange(channels)
    tap = c[None, :] - c[:, None] + pad             # tap[c, j] = j - c + pad
    valid = (tap >= 0) & (tap < k)
    w = jnp.where(valid, jnp.take(conv_weight, jnp.clip(tap, 0, k - 1)), 0.0)
    return (w * scale).astype(jnp.float32)


def _vmem_limit_bytes(default_capacity: int = 64 << 20) -> int:
    cap = default_capacity
    try:
        info = pltpu.get_tpu_info()
        cap = int(getattr(info, "vmem_capacity_bytes", None) or cap)
    except Exception:
        pass
    # ~48 MiB on 64-MiB-VMEM v7x, capped at 96 MiB on 128-MiB v5e/v6e.
    return max(32 << 20, min((cap * 3) // 4, 96 << 20))


def _pick_hw_tile(hw: int, c: int, itemsize: int, max_tile_bytes: int) -> int:
    """Largest lane-dense tile (multiple of 128) within budget.  Non-divisible
    HW is handled by a cdiv grid + tail masking, not by shrinking the tile."""
    max_lanes = (max_tile_bytes // max(1, c * itemsize)) // 128 * 128
    max_lanes = max(128, max_lanes)
    return hw if hw <= max_lanes else max_lanes


# ---------------------------------------------------------------------------
# Forward
# ---------------------------------------------------------------------------

def channel_att_forward(x: jnp.ndarray, conv_weight: jnp.ndarray, *,
                        force_two_pass: bool = False,
                        max_tile_bytes: int | None = None) -> jnp.ndarray:
    """x: (N, C, H, W); conv_weight: (k,)  (PyTorch Conv1d weight squeezed)."""
    N, C, H, W = x.shape
    HW = H * W
    itemsize = jnp.dtype(x.dtype).itemsize
    x3 = x.reshape(N, C, HW)                        # metadata reshape, lane-dense
    band = _band_matrix(conv_weight, C, 1.0 / float(HW))      # (C, C) f32

    vmem_limit = _vmem_limit_bytes()
    bytes_x = N * C * HW * itemsize
    band_bytes = C * C * 4

    # ---- Fused single-pass path: whole per-batch slab resident in VMEM ------
    # Need ~= double-buffered in + out (4x slab) + f32 reduce temp + band + slack.
    fused_need = 4 * C * HW * itemsize + 4 * C * HW + band_bytes + (2 << 20)
    if (not force_two_pass) and fused_need <= vmem_limit:
        out3 = pl.pallas_call(
            _fused_kernel,
            out_shape=jax.ShapeDtypeStruct((N, C, HW), x.dtype),
            grid_spec=pl.GridSpec(
                grid=(N,),
                in_specs=[pl.BlockSpec((1, C, HW), lambda b: (b, 0, 0)),
                          pl.BlockSpec((C, C), lambda b: (0, 0))],
                out_specs=pl.BlockSpec((1, C, HW), lambda b: (b, 0, 0)),
            ),
            compiler_params=pltpu.CompilerParams(
                # TODO(synk): with N == 1 only one v7x TensorCore is used; a
                # 2-way spatial split of the pooling would recover the idle TC.
                dimension_semantics=("parallel",),
                vmem_limit_bytes=vmem_limit,
            ),
            cost_estimate=pl.CostEstimate(
                flops=2 * N * C * HW + 2 * N * C * C,
                transcendentals=N * C,
                bytes_accessed=2 * bytes_x + band_bytes),
        )(x3, band)
        return out3.reshape(N, C, H, W)

    # ---- Two-pass fallback for slabs that do not fit in VMEM -----------------
    if max_tile_bytes is None:
        max_tile_bytes = max(1 << 20, min(8 << 20, vmem_limit // 6))
    hw_tile = _pick_hw_tile(HW, C, itemsize, max_tile_bytes)
    n_hw = pl.cdiv(HW, hw_tile)
    mask_tail = (HW % hw_tile) != 0

    pool_kernel = functools.partial(_pool_att_kernel, hw=HW, hw_tile=hw_tile,
                                    mask_tail=mask_tail)
    att = pl.pallas_call(
        pool_kernel,
        out_shape=jax.ShapeDtypeStruct((N, C, 1), jnp.float32),
        grid_spec=pl.GridSpec(
            grid=(N, n_hw),
            in_specs=[pl.BlockSpec((1, C, hw_tile), lambda b, t: (b, 0, t)),
                      pl.BlockSpec((C, C), lambda b, t: (0, 0))],
            out_specs=pl.BlockSpec((1, C, 1), lambda b, t: (b, 0, 0)),
        ),
        compiler_params=pltpu.CompilerParams(
            dimension_semantics=("parallel", "arbitrary"),
            vmem_limit_bytes=vmem_limit,
        ),
        cost_estimate=pl.CostEstimate(
            flops=N * C * HW + 2 * N * C * C,
            transcendentals=N * C,
            bytes_accessed=bytes_x + N * C * 4 + band_bytes),
    )(x3, band)

    out3 = pl.pallas_call(
        _scale_kernel,
        out_shape=jax.ShapeDtypeStruct((N, C, HW), x.dtype),
        grid_spec=pl.GridSpec(
            grid=(N, n_hw),
            in_specs=[pl.BlockSpec((1, C, hw_tile), lambda b, t: (b, 0, t)),
                      pl.BlockSpec((1, C, 1), lambda b, t: (b, 0, 0))],
            out_specs=pl.BlockSpec((1, C, hw_tile), lambda b, t: (b, 0, t)),
        ),
        compiler_params=pltpu.CompilerParams(
            dimension_semantics=("parallel", "parallel"),
            vmem_limit_bytes=vmem_limit,
        ),
        cost_estimate=pl.CostEstimate(
            flops=N * C * HW,
            transcendentals=0,
            bytes_accessed=2 * bytes_x + N * C * 4),
    )(x3, att)
    return out3.reshape(N, C, H, W)


# ---------------------------------------------------------------------------
# Pure-JAX reference (matches the PyTorch forward)
# ---------------------------------------------------------------------------

def channel_att_reference(x: jnp.ndarray, conv_weight: jnp.ndarray) -> jnp.ndarray:
    N, C, H, W = x.shape
    k = conv_weight.shape[0]
    pad = (k - 1) // 2
    y = jnp.mean(x, axis=(2, 3))                    # (N, C)
    y_pad = jnp.pad(y, ((0, 0), (pad, pad)))
    conv = jnp.zeros_like(y)
    for j in range(k):
        conv = conv + conv_weight[j] * y_pad[:, j:j + C]
    att = jax.nn.sigmoid(conv)
    return x * att[:, :, None, None]


if __name__ == "__main__":
    key = jax.random.PRNGKey(0)
    kx, kx2, kw = jax.random.split(key, 3)

    # Shapes consistent with the module: batch=2, channels=16, 16x16 spatial.
    N, C, H, W = 2, 16, 16, 16
    x = jax.random.normal(kx, (N, C, H, W), dtype=jnp.float32)
    ksz = _eca_kernel_size(C)                       # C=16 -> k=3
    conv_weight = jax.random.normal(kw, (ksz,), dtype=jnp.float32) * 0.5

    # Tolerance covers the tiny in-kernel (C, C) @ (C, 1) band matmul whose MXU
    # f32 precision may be below full f32; all other math is bit-faithful.
    tol = dict(atol=2e-3, rtol=2e-3)

    # 1) Fused single-pass path (default whenever the per-batch slab fits VMEM).
    out = jax.block_until_ready(channel_att_forward(x, conv_weight))
    ref = channel_att_reference(x, conv_weight)
    assert out.shape == x.shape
    assert jnp.allclose(out, ref, **tol), "fused path mismatch vs reference"

    # 2) Two-pass fallback, forced, on a 13x13 head (HW=169, not a multiple of
    #    128) to exercise the cdiv grid, tail-masked reduction and the in-kernel
    #    conv/sigmoid finalize.
    x2 = jax.random.normal(kx2, (N, C, 13, 13), dtype=jnp.float32)
    out2 = jax.block_until_ready(
        channel_att_forward(x2, conv_weight, force_two_pass=True,
                            max_tile_bytes=1))      # tiny budget -> 128-lane tiles
    ref2 = channel_att_reference(x2, conv_weight)
    assert out2.shape == x2.shape
    assert jnp.allclose(out2, ref2, **tol), "two-pass path mismatch vs reference"

    print("KERNEL_OK")
</pallas_src>

<mosaic_0001>
module attributes {stable_mosaic.version = 11 : i64} {
  func.func @_fused_kernel(%arg0: i32, %arg1: memref<1x16x256xf32, #tpu.memory_space<vmem>>, %arg2: memref<16x16xf32, #tpu.memory_space<vmem>>, %arg3: memref<1x16x256xf32, #tpu.memory_space<vmem>>) attributes {dimension_semantics = [#tpu.dimension_semantics<parallel>], iteration_bounds = array<i64: 2>, scalar_prefetch = 0 : i64, scratch_operands = 0 : i64, tpu.core_type = #tpu.core_type<tc>, window_params = [{transform_indices = @transform_0, window_bounds = array<i64: 1, 16, 256>}, {pipeline_mode = #tpu.pipeline_mode<synchronous>, transform_indices = @transform_1, window_bounds = array<i64: 16, 16>}, {transform_indices = @transform_2, window_bounds = array<i64: 1, 16, 256>}]} {
    %c0 = arith.constant 0 : index
    %c0_0 = arith.constant 0 : index
    %c0_1 = arith.constant 0 : index
    %0 = vector.load %arg1[%c0, %c0_0, %c0_1] : memref<1x16x256xf32, #tpu.memory_space<vmem>>, vector<1x16x256xf32>
    %1 = vector.shape_cast %0 : vector<1x16x256xf32> to vector<16x256xf32>
    %cst = arith.constant dense<0.000000e+00> : vector<16xf32>
    %2 = vector.multi_reduction <add>, %1, %cst [1] : vector<16x256xf32> to vector<16xf32>
    %3 = vector.shape_cast %2 : vector<16xf32> to vector<16x1xf32>
    %c0_2 = arith.constant 0 : index
    %c0_3 = arith.constant 0 : index
    %4 = vector.load %arg2[%c0_2, %c0_3] : memref<16x16xf32, #tpu.memory_space<vmem>>, vector<16x16xf32>
    %cst_4 = arith.constant dense<0.000000e+00> : vector<16x1xf32>
    %5 = tpu.matmul %4, %3, %cst_4 {dimension_numbers = #tpu.dot_dimension_numbers<[1], [0], [0], [1], [0, 0, 1, 1], [], []>} : vector<16x16xf32>, vector<16x1xf32>, vector<16x1xf32> -> vector<16x1xf32>
    %cst_5 = arith.constant 0.000000e+00 : f32
    %6 = vector.broadcast %cst_5 : f32 to vector<16x1xf32>
    %7 = arith.subf %6, %5 : vector<16x1xf32>
    %8 = math.exp %7 : vector<16x1xf32>
    %cst_6 = arith.constant 1.000000e+00 : f32
    %9 = vector.broadcast %cst_6 : f32 to vector<16x1xf32>
    %10 = arith.addf %9, %8 : vector<16x1xf32>
    %cst_7 = arith.constant 1.000000e+00 : f32
    %11 = vector.broadcast %cst_7 : f32 to vector<16x1xf32>
    %12 = arith.divf %11, %10 : vector<16x1xf32>
    %13 = vector.broadcast %12 : vector<16x1xf32> to vector<16x256xf32>
    %14 = arith.mulf %1, %13 : vector<16x256xf32>
    %c0_8 = arith.constant 0 : index
    %c0_9 = arith.constant 0 : index
    %c0_10 = arith.constant 0 : index
    %15 = vector.load %arg3[%c0_8, %c0_9, %c0_10] : memref<1x16x256xf32, #tpu.memory_space<vmem>>, vector<1x16x256xf32>
    %16 = vector.shape_cast %15 : vector<1x16x256xf32> to vector<16x256xf32>
    %17 = vector.shape_cast %14 : vector<16x256xf32> to vector<1x16x256xf32>
    tpu.vector_store %arg3[%c0_8, %c0_9, %c0_10], %17 {strides = array<i32>} : memref<1x16x256xf32, #tpu.memory_space<vmem>>, vector<1x16x256xf32>,
    return
  }
  func.func @transform_0(%arg0: i32) -> (i32, i32, i32) {
    %c0_i32 = arith.constant 0 : i32
    %c0_i32_0 = arith.constant 0 : i32
    %c0_i32_1 = arith.constant 0 : i32
    return %arg0, %c0_i32, %c0_i32_0 : i32, i32, i32
  }
  func.func @transform_1(%arg0: i32) -> (i32, i32) {
    %c0_i32 = arith.constant 0 : i32
    %c0_i32_0 = arith.constant 0 : i32
    %c0_i32_1 = arith.constant 0 : i32
    return %c0_i32, %c0_i32_0 : i32, i32
  }
  func.func @transform_2(%arg0: i32) -> (i32, i32, i32) {
    %c0_i32 = arith.constant 0 : i32
    %c0_i32_0 = arith.constant 0 : i32
    %c0_i32_1 = arith.constant 0 : i32
    return %arg0, %c0_i32, %c0_i32_0 : i32, i32, i32
  }
}

</mosaic_0001>

<llo_original>
// kernel: tpu_custom_call.1
$region0: #{tpu_custom_call.1}
  #allocation0 [shape = 'u32[]', space=smem, size = 0x4, offset = 0x4, fixed_abs, tag = 'smem constant byte address 0x4 - core index']
  #allocation1 [shape = 'u32[144,128]{1,0:T(1,128)}', space=vmem, size = 0x12000, scoped, tag = 'internal scratch']
  %s0 = inlined_call_operand.hbm [shape: f32[2,16,256], index: 0, kind: input, shape index: {}]
  %s1 = inlined_call_operand.hbm [shape: f32[16,16], index: 1, kind: input, shape index: {}]
  %s2 = inlined_call_operand.hbm [shape: f32[2,16,256], index: 2, kind: output, shape index: {}]
  %s3 = sld [smem:[#allocation0]]
  $region49: #{tpu_custom_call.1} parent=0
    _
  %s5 = ssub.s32 1, %s3
  %s6 = scalar_select 0, %s5, %s3
  $region1: #{tpu_custom_call.1} parent=0
    #allocation2 [shape = 'u8[32768]{0}', space=vmem, size = 0x8000, scoped, tag = 'input window, operand 0']
    #allocation3 [shape = 's32[2]{0}', space=sflag, size = 0x8, scoped, tag = 'scoped memory for tpu_custom_call.1']
    #allocation4 [shape = 's32[2]{0}', space=sflag, size = 0x8, scoped, tag = 'scoped memory for tpu_custom_call.1']
    #allocation5 [shape = 'u8[8192]{0}', space=vmem, size = 0x2000, scoped, tag = 'input window, operand 1, single buffered']
    #allocation6 [shape = 's32[1]{0}', space=sflag, size = 0x4, scoped, tag = 'scoped memory for tpu_custom_call.1']
    #allocation7 [shape = 'u8[32768]{0}', space=vmem, size = 0x8000, scoped, tag = 'output window, operand 0']
    %7 = vsyncpa [#allocation3], 0
    %s8 = scalar_lea.sflag [#allocation3], 1
    %9 = vsyncpa %s8, 0
    %10 = vsyncpa [#allocation6], 0
    %11 = vsyncpa [#allocation4], 0
    %s12 = scalar_lea.sflag [#allocation4], 1
    %13 = vsyncpa %s12, 0
    loop: start=0, step=1, limit=4
    $region2: #{tpu_custom_call.1} parent=1 // loop_pre_header
      _
    $region3: #{tpu_custom_call.1} parent=1 // loop_header
      %s15 = sphi 0, %s19
      %p16 = scmp.ge.s32.totalorder %s15, 4
      %s25 = sphi 0, %s27
      %s28 = sphi 0, %s25
      %s29 = sphi 0, %s28
      %s45 = sphi 0, %s29
      %s49 = sphi 0, %s49
      %s51 = sphi 0, %s49
      %s52 = sphi 0, %s51
      %s66 = sphi 0, %s52
      %s72 = sphi 0, %s74
      %s75 = sphi 0, %s72
      %s76 = sphi 0, %s75
      %s92 = sphi 0, %s76
    $region4: #{tpu_custom_call.1} parent=1 // loop_header_branch
      %18 = sbr.rel (%p16) target = $region8
    $region5: #{tpu_custom_call.1} parent=1 // loop_body
      %s20 = ssub.s32 %s15, 1
      %s21 = ssub.s32 %s15, 2
      %s22 = sadd.s32 %s15, 1
      %s23 = ssub.s32 %s15, %s22
      %p24 = scmp.eq.s32.totalorder %s23, 0
      %s26 = sadd.s32 %s25, 1
      %s27 = scalar_select %p24, %s25, %s26
      %p30 = pneg %p24
      %p31 = scmp.eq.s32.totalorder %s15, 1
      %p32 = por %p30, %p31
      %p33 = scmp.ne.s32.totalorder %s25, %s28
      %p34 = scmp.eq.s32.totalorder %s15, 0
      %p35 = por %p33, %p34
      %p36 = scmp.ne.s32.totalorder %s25, %s28
      %p37 = scmp.eq.s32.totalorder %s20, 1
      %p38 = por %p36, %p37
      %p39 = scmp.ne.s32.totalorder %s28, %s29
      %p40 = scmp.eq.s32.totalorder %s20, 0
      %p41 = por %p39, %p40
      %p42 = scmp.ne.s32.totalorder %s28, %s29
      %p43 = scmp.eq.s32.totalorder %s21, 1
      %p44 = por %p42, %p43
      %p46 = scmp.ne.s32.totalorder %s29, %s45
      %p47 = scmp.eq.s32.totalorder %s21, 0
      %p48 = por %p46, %p47
      %s50 = sadd.s32 %s49, 1
      %p53 = scmp.eq.s32.totalorder %s15, 1
      %p54 = scmp.ne.s32.totalorder %s49, %s51
      %p55 = scmp.eq.s32.totalorder %s15, 0
      %p56 = por %p54, %p55
      %p57 = scmp.ne.s32.totalorder %s49, %s51
      %p58 = scmp.eq.s32.totalorder %s20, 1
      %p59 = por %p57, %p58
      %p60 = scmp.ne.s32.totalorder %s51, %s52
      %p61 = scmp.eq.s32.totalorder %s20, 0
      %p62 = por %p60, %p61
      %p63 = scmp.ne.s32.totalorder %s51, %s52
      %p64 = scmp.eq.s32.totalorder %s21, 1
      %p65 = por %p63, %p64
      %p67 = scmp.ne.s32.totalorder %s52, %s66
      %p68 = scmp.eq.s32.totalorder %s21, 0
      %p69 = por %p67, %p68
      %s70 = ssub.s32 %s15, %s22
      %p71 = scmp.eq.s32.totalorder %s70, 0
      %s73 = sadd.s32 %s72, 1
      %s74 = scalar_select %p71, %s72, %s73
      %p77 = pneg %p71
      %p78 = scmp.eq.s32.totalorder %s15, 1
      %p79 = por %p77, %p78
      %p80 = scmp.ne.s32.totalorder %s72, %s75
      %p81 = scmp.eq.s32.totalorder %s15, 0
      %p82 = por %p80, %p81
      %p83 = scmp.ne.s32.totalorder %s72, %s75
      %p84 = scmp.eq.s32.totalorder %s20, 1
      %p85 = por %p83, %p84
      %p86 = scmp.ne.s32.totalorder %s75, %s76
      %p87 = scmp.eq.s32.totalorder %s20, 0
      %p88 = por %p86, %p87
      %p89 = scmp.ne.s32.totalorder %s75, %s76
      %p90 = scmp.eq.s32.totalorder %s21, 1
      %p91 = por %p89, %p90
      %p93 = scmp.ne.s32.totalorder %s76, %s92
      %p94 = scmp.eq.s32.totalorder %s21, 0
      %p95 = por %p93, %p94
      %p96 = scmp.le.s32.totalorder 1, %s15
      %p97 = scmp.lt.s32.totalorder %s15, 3
      %p98 = pnand %p96, %p97
      %p99 = pneg %p98
      // Predicated region
      $region9: #{tpu_custom_call.1} parent=5 // pred_check
        _
      $region10: #{tpu_custom_call.1} parent=5 // pred_check_branch
        %101 = sbr.rel (%p98) target = $region12
      $region11: #{tpu_custom_call.1} parent=5 // pred_region
        %s102 = ssub.s32 %s15, 1
        // Predicated region
        $region13: #{tpu_custom_call.1} parent=11 // pred_check
          %p103 = pneg %p62
        $region14: #{tpu_custom_call.1} parent=11 // pred_check_branch
          %105 = sbr.rel (%p103) target = $region16
        $region15: #{tpu_custom_call.1} parent=11 // pred_region
          %s107 = ssub.s32 256, 256
          %108 = vsyncadd [#allocation6], %s107
          %s109 = sshll.u32 [#allocation5], 4
          %s110 = int_to_ptr.vmem [resolvable:$true] %s109
          %115 = dma.hbm_to_vmem [thread:$0]  %s1, 256, %s110, [#allocation6], 128, 128, 8
        $region16: #{tpu_custom_call.1} parent=11 // pred_fallthru
          _
      $region12: #{tpu_custom_call.1} parent=5 // pred_fallthru
        _
      %p116 = scmp.lt.s32.totalorder %s15, 2
      // Predicated region
      $region17: #{tpu_custom_call.1} parent=5 // pred_check
        %p117 = pneg %p116
      $region18: #{tpu_custom_call.1} parent=5 // pred_check_branch
        %119 = sbr.rel (%p117) target = $region20
      $region19: #{tpu_custom_call.1} parent=5 // pred_region
        // Predicated region
        $region21: #{tpu_custom_call.1} parent=19 // pred_check
          %p120 = pneg %p35
        $region22: #{tpu_custom_call.1} parent=19 // pred_check_branch
          %122 = sbr.rel (%p120) target = $region24
        $region23: #{tpu_custom_call.1} parent=19 // pred_region
          %s123 = sand.u32 %s25, 1
          %s124 = scalar_lea.sflag [#allocation3], %s123
          %s125 = sand.u32 %s25, 1
          %s126 = smul.addr %s125, 32
          %s127 = scalar_lea.vmem [#allocation2], %s126
          %s129 = ssub.s32 512, 512
          %130 = vsyncadd %s124, %s129
          %s131 = smul.addr %s15, 4
          %s132 = smul.addr %s131, 128
          %s133 = scalar_lea.hbm %s0, %s132
          %s134 = sshll.u32 %s127, 4
          %s135 = int_to_ptr.vmem [resolvable:$true] %s134
          %140 = dma.hbm_to_vmem [thread:$0]  %s133, 512, %s135, %s124, 256, 256, 16
        $region24: #{tpu_custom_call.1} parent=19 // pred_fallthru
          _
      $region20: #{tpu_custom_call.1} parent=5 // pred_fallthru
        _
      %p141 = scmp.le.s32.totalorder 1, %s15
      %p142 = scmp.lt.s32.totalorder %s15, 3
      %p143 = pnand %p141, %p142
      %p144 = pneg %p143
      // Predicated region
      $region25: #{tpu_custom_call.1} parent=5 // pred_check
        _
      $region26: #{tpu_custom_call.1} parent=5 // pred_check_branch
        %146 = sbr.rel (%p143) target = $region28
      $region27: #{tpu_custom_call.1} parent=5 // pred_region
        %s147 = ssub.s32 %s15, 1
        %s148 = sand.u32 %s28, 1
        %s149 = scalar_lea.sflag [#allocation3], %s148
        %s150 = sand.u32 %s28, 1
        %s151 = smul.addr %s150, 32
        %s152 = scalar_lea.vmem [#allocation2], %s151
        // Predicated region
        $region29: #{tpu_custom_call.1} parent=27 // pred_check
          %p153 = pneg %p41
        $region30: #{tpu_custom_call.1} parent=27 // pred_check_branch
          %155 = sbr.rel (%p153) target = $region32
        $region31: #{tpu_custom_call.1} parent=27 // pred_region
          %156 = dma.done %s149, 512
        $region32: #{tpu_custom_call.1} parent=27 // pred_fallthru
          _
        // Predicated region
        $region33: #{tpu_custom_call.1} parent=27 // pred_check
          %p157 = pneg %p62
        $region34: #{tpu_custom_call.1} parent=27 // pred_check_branch
          %159 = sbr.rel (%p157) target = $region36
        $region35: #{tpu_custom_call.1} parent=27 // pred_region
          %160 = dma.done [#allocation6], 256
        $region36: #{tpu_custom_call.1} parent=27 // pred_fallthru
          _
        %s161 = sand.u32 %s28, 1
        %s162 = scalar_lea.sflag [#allocation3], %s161
        %s163 = sand.u32 %s28, 1
        %s164 = smul.addr %s163, 32
        %s165 = scalar_lea.vmem [#allocation2], %s164
        %p166 = pneg %p41
        %p167 = pneg %p38
        %p168 = pneg %p62
        %p169 = pneg %p59
        %p170 = pneg %p88
        %p171 = pneg %p85
        %s172 = sand.u32 %s75, 1
        %s173 = scalar_lea.sflag [#allocation4], %s172
        %s174 = sand.u32 %s75, 1
        %s175 = smul.addr %s174, 32
        %s176 = scalar_lea.vmem [#allocation7], %s175
        %v177 = vld [vmem:[%s152] sm:$0xff]
        %v178 = vld [vmem:[%s152 + $0x8] sm:$0xff]
        %v179 = vld [vmem:[%s152 + $0x10] sm:$0xff]
        %v180 = vld [vmem:[%s152 + $0x18] sm:$0xff]
        %v181 = vadd.f32 %v177, %v178
        %182 = vadd.xlane.f32.xlu0 %v181
        %v183 = vpop.xlane.xlu0 %182
        %v184 = vadd.f32 %v179, %v180
        %185 = vadd.xlane.f32.xlu0 %v184
        %v186 = vpop.xlane.xlu0 %185
        %v187 = vld [vmem:[#allocation5] sm:$0xff]
        %v188 = vld [vmem:[#allocation5 + $0x8] sm:$0xff]
        %vm189 = vcmask 130048
        %v191 = vsel %vm189, %v187, 0
        %v194 = vsel %vm189, %v188, 0
        %196 = vmatprep.subr.mxu0 0.0
        %197 = vmatpush1.msra.mxu0 %v183
        %198 = vmatprep.subr.mxu0 0.0
        %199 = vmatpush1.msra.mxu0 %v186
        %200 = vmatprep.subr.mxu0 0.0
        %201 = vmatpush1.msra.mxu0 0.0
        %202 = vmatprep.subr.mxu0 0.0
        %203 = vmatpush1.msra.mxu0 0.0
        %204 = vmatprep.subr.mxu0 0.0
        %205 = vmatpush1.msra.mxu0 0.0
        %206 = vmatprep.subr.mxu0 0.0
        %207 = vmatpush1.msra.mxu0 0.0
        %208 = vmatprep.subr.mxu0 0.0
        %209 = vmatpush1.msra.mxu0 0.0
        %210 = vmatprep.subr.mxu0 0.0
        %211 = vmatpush1.msra.mxu0 0.0
        %212 = vmatprep.subr.mxu0 0.0
        %213 = vmatpush1.msra.mxu0 0.0
        %214 = vmatprep.subr.mxu0 0.0
        %215 = vmatpush1.msra.mxu0 0.0
        %216 = vmatprep.subr.mxu0 0.0
        %217 = vmatpush1.msra.mxu0 0.0
        %218 = vmatprep.subr.mxu0 0.0
        %219 = vmatpush1.msra.mxu0 0.0
        %220 = vmatprep.subr.mxu0 0.0
        %221 = vmatpush1.msra.mxu0 0.0
        %222 = vmatprep.subr.mxu0 0.0
        %223 = vmatpush1.msra.mxu0 0.0
        %224 = vmatprep.subr.mxu0 0.0
        %225 = vmatpush1.msra.mxu0 0.0
        %226 = vmatprep.subr.mxu0 0.0
        %227 = vmatpush1.msra.mxu0 0.0
        %228 = vmatprep.subr.mxu0 0.0
        %229 = vmatpush1.msra.mxu0 0.0
        %230 = vmatprep.subr.mxu0 0.0
        %231 = vmatpush1.msra.mxu0 0.0
        %232 = vmatprep.subr.mxu0 0.0
        %233 = vmatpush1.msra.mxu0 0.0
        %234 = vmatprep.subr.mxu0 0.0
        %235 = vmatpush1.msra.mxu0 0.0
        %236 = vmatprep.subr.mxu0 0.0
        %237 = vmatpush1.msra.mxu0 0.0
        %238 = vmatprep.subr.mxu0 0.0
        %239 = vmatpush1.msra.mxu0 0.0
        %240 = vmatprep.subr.mxu0 0.0
        %241 = vmatpush1.msra.mxu0 0.0
        %242 = vmatprep.subr.mxu0 0.0
        %243 = vmatpush1.msra.mxu0 0.0
        %244 = vmatprep.subr.mxu0 0.0
        %245 = vmatpush1.msra.mxu0 0.0
        %246 = vmatprep.subr.mxu0 0.0
        %247 = vmatpush1.msra.mxu0 0.0
        %248 = vmatprep.subr.mxu0 0.0
        %249 = vmatpush1.msra.mxu0 0.0
        %250 = vmatprep.subr.mxu0 0.0
        %251 = vmatpush1.msra.mxu0 0.0
        %252 = vmatprep.subr.mxu0 0.0
        %253 = vmatpush1.msra.mxu0 0.0
        %254 = vmatprep.subr.mxu0 0.0
        %255 = vmatpush1.msra.mxu0 0.0
        %256 = vmatprep.subr.mxu0 0.0
        %257 = vmatpush1.msra.mxu0 0.0
        %258 = vmatprep.subr.mxu0 0.0
        %259 = vmatpush1.msra.mxu0 0.0
        %260 = vmatprep.mubr.f32.mxu0 0.0
        %261 = vmatmul.mubr.f32.gmra.mrb[0].mxu0 %v191
        %v262 = vpop.f32.mrb[0].mxu0
        %v263 = vadd.f32 0.0, %v262
        %v264 = vpop.f32.mrb[0].mxu0
        %265 = vmatprep.mubr.f32.mxu0 0.0
        %266 = vmatmul.mubr.f32.gmra.mrb[0].mxu0 %v194
        %v267 = vpop.f32.mrb[0].mxu0
        %v268 = vadd.f32 0.0, %v267
        %v269 = vpop.f32.mrb[0].mxu0
        %270 = vdwg.mxu0
        %v271 = vsub.f32 0.0, %v263
        %v272 = vsub.f32 0.0, %v268
        %v273 = vmul.f32 %v271, 1.442695
        %v274 = vpow.pop %v273
        %v275 = vmul.f32 %v272, 1.442695
        %v276 = vpow.pop %v275
        %v277 = vadd.f32 %v274, 1.0
        %v278 = vadd.f32 %v276, 1.0
        %v279 = vrcp.pop %v277
        %v280 = vmul.f32 1.0, %v279
        %v281 = vrcp.pop %v278
        %v282 = vmul.f32 1.0, %v281
        %284 = vset.pattern.permute.xlu0 0
        %285 = vperm.xlu0 %284, %v280
        %v286 = vpop.permute.xlu0 %285
        %289 = vset.pattern.permute.xlu0 0
        %290 = vperm.xlu0 %289, %v282
        %v291 = vpop.permute.xlu0 %290
        %v293 = vmul.f32 %v177, %v286
        %v294 = vmul.f32 %v178, %v286
        %v295 = vmul.f32 %v179, %v291
        %v296 = vmul.f32 %v180, %v291
        %297 = vst [vmem:[%s176] sm:$0xff] %v293
        %298 = vst [vmem:[%s176 + $0x8] sm:$0xff] %v294
        %299 = vst [vmem:[%s176 + $0x10] sm:$0xff] %v295
        %300 = vst [vmem:[%s176 + $0x18] sm:$0xff] %v296
        %s301 = sand.u32 %s75, 1
        %s302 = scalar_lea.sflag [#allocation4], %s301
        %s303 = sand.u32 %s75, 1
        %s304 = smul.addr %s303, 32
        %s305 = scalar_lea.vmem [#allocation7], %s304
        // Predicated region
        $region37: #{tpu_custom_call.1} parent=27 // pred_check
          %p306 = pneg %p85
        $region38: #{tpu_custom_call.1} parent=27 // pred_check_branch
          %308 = sbr.rel (%p306) target = $region40
        $region39: #{tpu_custom_call.1} parent=27 // pred_region
          %s310 = ssub.s32 512, 512
          %311 = vsyncadd %s302, %s310
          %s312 = smul.addr %s20, 4
          %s313 = smul.addr %s312, 128
          %s314 = scalar_lea.hbm %s2, %s313
          %s315 = sshll.u32 %s305, 4
          %s316 = int_to_ptr.vmem [resolvable:$true] %s315
          %321 = dma.vmem_to_hbm [thread:$0]  %s316, 512, %s314, %s302, 256, 256, 16
        $region40: #{tpu_custom_call.1} parent=27 // pred_fallthru
          _
      $region28: #{tpu_custom_call.1} parent=5 // pred_fallthru
        _
      %p322 = scmp.le.s32.totalorder 2, %s15
      // Predicated region
      $region41: #{tpu_custom_call.1} parent=5 // pred_check
        %p323 = pneg %p322
      $region42: #{tpu_custom_call.1} parent=5 // pred_check_branch
        %325 = sbr.rel (%p323) target = $region44
      $region43: #{tpu_custom_call.1} parent=5 // pred_region
        %s326 = ssub.s32 %s15, 2
        // Predicated region
        $region45: #{tpu_custom_call.1} parent=43 // pred_check
          %p327 = pneg %p91
        $region46: #{tpu_custom_call.1} parent=43 // pred_check_branch
          %329 = sbr.rel (%p327) target = $region48
        $region47: #{tpu_custom_call.1} parent=43 // pred_region
          %s330 = sand.u32 %s76, 1
          %s331 = scalar_lea.sflag [#allocation4], %s330
          %s332 = sand.u32 %s76, 1
          %s333 = smul.addr %s332, 32
          %s334 = scalar_lea.vmem [#allocation7], %s333
          %335 = dma.done %s331, 512
        $region48: #{tpu_custom_call.1} parent=43 // pred_fallthru
          _
      $region44: #{tpu_custom_call.1} parent=5 // pred_fallthru
        _
    $region6: #{tpu_custom_call.1} parent=1 // loop_footer
      %s19 = sadd.s32 1, %s15
    $region7: #{tpu_custom_call.1} parent=1 // loop_footer_branch
      %14 = sbr.rel target = $region3
    $region8: #{tpu_custom_call.1} parent=1 // loop_exit
      _
    %336 = vsyncpa [#allocation3], 1
    %s337 = scalar_lea.sflag [#allocation3], 1
    %338 = vsyncpa %s337, 1
    %339 = vsyncpa [#allocation6], 1
    %340 = vsyncpa [#allocation4], 1
    %s341 = scalar_lea.sflag [#allocation4], 1
    %342 = vsyncpa %s341, 1

</llo_original>
